<compile_context>
chip_gen: v6e
topology: v6e:2x2x1
jax: 0.10.0
libtpu: 0.0.40
codegen_flags: <defaults>
</compile_context>

<pallas_src>
import functools

import jax
import jax.numpy as jnp
from jax.experimental import pallas as pl
from jax.experimental.pallas import tpu as pltpu


def _box_head_predictor_kernel(
    x_ref,            # (TN, F)   bf16 flattened pooled ROI features
    w6_ref, b6_ref,   # fc6: (F, H) bf16, (1, H) f32
    w7_ref, b7_ref,   # fc7: (H, H) bf16, (1, H) f32
    wh_ref, bh_ref,   # fused head: (H, OUTP) bf16, (1, OUTP) f32  (lane-padded)
    out_ref,          # (TN, OUTP) f32: [:, :C] = class logits, [:, C:C+4C] = deltas
):
    x = x_ref[...]                                   # bf16 operand, f32 accumulate

    # TwoMLPHead: fc6 -> ReLU -> fc7 -> ReLU  (bias/ReLU in f32)
    h = jnp.dot(x, w6_ref[...], preferred_element_type=jnp.float32) + b6_ref[...]
    h = jnp.maximum(h, 0.0)
    h = jnp.dot(h.astype(jnp.bfloat16), w7_ref[...],
                preferred_element_type=jnp.float32) + b7_ref[...]
    h = jnp.maximum(h, 0.0)

    # Fused FastRCNNPredictor: [cls_score | bbox_pred] in one lane-padded matmul.
    out = jnp.dot(h.astype(jnp.bfloat16), wh_ref[...],
                  preferred_element_type=jnp.float32) + bh_ref[...]
    out_ref[...] = out.astype(out_ref.dtype)


@functools.partial(jax.jit, static_argnames=("tile_n",))
def box_head_predictor(x_flat, w6, b6, w7, b7, wc, bc, wb, bb, *, tile_n=128):
    """Fused ROI box head + predictor.

    x_flat: (N, F) float32 — flattened (NCHW row-major) pooled ROI features.
    Returns (class_logits (N, C), box_deltas (N, 4C)) in float32.
    """
    n, f = x_flat.shape
    h = w6.shape[1]
    c = wc.shape[1]
    c4 = wb.shape[1]

    # ---- fuse cls/bbox head and pad its output to full 128-lane width --------
    head_w = jnp.concatenate([wc, wb], axis=1)          # (H, C + 4C)
    head_b = jnp.concatenate([bc, bb], axis=1)          # (1, C + 4C)
    out_dim = c + c4
    out_pad = (-out_dim) % 128
    out_dim_p = out_dim + out_pad
    if out_pad:
        head_w = jnp.pad(head_w, ((0, 0), (0, out_pad)))
        head_b = jnp.pad(head_b, ((0, 0), (0, out_pad)))

    # ---- bf16 matmul operands (cast once here, not per grid step) ------------
    x16 = x_flat.astype(jnp.bfloat16)
    w6_16 = w6.astype(jnp.bfloat16)
    w7_16 = w7.astype(jnp.bfloat16)
    head_w16 = head_w.astype(jnp.bfloat16)

    # ---- pad ROI rows to a multiple of tile_n (real batches rarely divide) ---
    n_pad = (-n) % tile_n
    if n_pad:
        x16 = jnp.pad(x16, ((0, n_pad), (0, 0)))
    n_p = n + n_pad
    grid = (n_p // tile_n,)

    full = lambda i: (0, 0)            # whole weight resident every grid step
    rows = lambda i: (i, 0)            # tile over ROI rows

    grid_spec = pltpu.PrefetchScalarGridSpec(
        num_scalar_prefetch=0,
        grid=grid,
        in_specs=[
            pl.BlockSpec((tile_n, f), rows),
            pl.BlockSpec((f, h), full), pl.BlockSpec((1, h), full),
            pl.BlockSpec((h, h), full), pl.BlockSpec((1, h), full),
            pl.BlockSpec((h, out_dim_p), full), pl.BlockSpec((1, out_dim_p), full),
        ],
        out_specs=pl.BlockSpec((tile_n, out_dim_p), rows),
    )

    fused = pl.pallas_call(
        _box_head_predictor_kernel,
        out_shape=jax.ShapeDtypeStruct((n_p, out_dim_p), jnp.float32),
        grid_spec=grid_spec,
        compiler_params=pltpu.CompilerParams(
            dimension_semantics=("parallel",)),
    )(x16, w6_16, b6, w7_16, b7, head_w16, head_b)

    scores = fused[:n, :c]
    deltas = fused[:n, c:c + c4]
    return scores, deltas


def _reference(x_flat, w6, b6, w7, b7, wc, bc, wb, bb):
    h = jnp.maximum(x_flat @ w6 + b6, 0.0)
    h = jnp.maximum(h @ w7 + b7, 0.0)
    return h @ wc + bc, h @ wb + bb


if __name__ == "__main__":
    # Small shapes consistent with the module's ROI head structure:
    #   num_rois=300 pooled ROI features (not a tile multiple, exercises
    #   padding), C=16 channels, P=4 pooled spatial, hidden size 128,
    #   num_classes = 2 + 1 (background).
    num_rois = 300
    channels = 16
    pool = 4
    hidden = 128
    num_classes = 2 + 1

    in_features = channels * pool * pool  # 256

    key = jax.random.PRNGKey(0)
    keys = jax.random.split(key, 10)

    # Pooled ROI features in NCHW-per-ROI layout, then flattened row-major
    # (matches torch.flatten(x, start_dim=1) on an NCHW tensor).
    roi_feats = jax.random.normal(keys[0], (num_rois, channels, pool, pool),
                                  dtype=jnp.float32)
    x_flat = roi_feats.reshape(num_rois, in_features)

    # Deterministic parameter init (stored as (in, out) = PyTorch weight.T).
    s6 = 1.0 / jnp.sqrt(in_features)
    s7 = 1.0 / jnp.sqrt(hidden)
    w6 = jax.random.uniform(keys[1], (in_features, hidden), jnp.float32, -s6, s6)
    b6 = jax.random.uniform(keys[2], (1, hidden), jnp.float32, -s6, s6)
    w7 = jax.random.uniform(keys[3], (hidden, hidden), jnp.float32, -s7, s7)
    b7 = jax.random.uniform(keys[4], (1, hidden), jnp.float32, -s7, s7)
    wc = jax.random.uniform(keys[5], (hidden, num_classes), jnp.float32, -s7, s7)
    bc = jax.random.uniform(keys[6], (1, num_classes), jnp.float32, -s7, s7)
    wb = jax.random.uniform(keys[7], (hidden, num_classes * 4), jnp.float32, -s7, s7)
    bb = jax.random.uniform(keys[8], (1, num_classes * 4), jnp.float32, -s7, s7)

    scores, deltas = box_head_predictor(x_flat, w6, b6, w7, b7, wc, bc, wb, bb)
    jax.block_until_ready((scores, deltas))

    ref_scores, ref_deltas = _reference(x_flat, w6, b6, w7, b7, wc, bc, wb, bb)
    assert scores.shape == (num_rois, num_classes)
    assert deltas.shape == (num_rois, num_classes * 4)
    # bf16 MXU operands with f32 accumulation: loosen tolerance vs f32 reference.
    assert jnp.allclose(scores, ref_scores, atol=2e-2, rtol=2e-2)
    assert jnp.allclose(deltas, ref_deltas, atol=2e-2, rtol=2e-2)

    print("KERNEL_OK")
</pallas_src>

<mosaic_0001>
module attributes {stable_mosaic.version = 11 : i64} {
  func.func @_box_head_predictor_kernel(%arg0: i32, %arg1: memref<128x256xbf16, #tpu.memory_space<vmem>>, %arg2: memref<256x128xbf16, #tpu.memory_space<vmem>>, %arg3: memref<1x128xf32, #tpu.memory_space<vmem>>, %arg4: memref<128x128xbf16, #tpu.memory_space<vmem>>, %arg5: memref<1x128xf32, #tpu.memory_space<vmem>>, %arg6: memref<128x128xbf16, #tpu.memory_space<vmem>>, %arg7: memref<1x128xf32, #tpu.memory_space<vmem>>, %arg8: memref<128x128xf32, #tpu.memory_space<vmem>>) attributes {dimension_semantics = [#tpu.dimension_semantics<parallel>], iteration_bounds = array<i64: 3>, scalar_prefetch = 0 : i64, scratch_operands = 0 : i64, tpu.core_type = #tpu.core_type<tc>, window_params = [{transform_indices = @transform_0, window_bounds = array<i64: 128, 256>}, {pipeline_mode = #tpu.pipeline_mode<synchronous>, transform_indices = @transform_1, window_bounds = array<i64: 256, 128>}, {pipeline_mode = #tpu.pipeline_mode<synchronous>, transform_indices = @transform_2, window_bounds = array<i64: 1, 128>}, {pipeline_mode = #tpu.pipeline_mode<synchronous>, transform_indices = @transform_3, window_bounds = array<i64: 128, 128>}, {pipeline_mode = #tpu.pipeline_mode<synchronous>, transform_indices = @transform_4, window_bounds = array<i64: 1, 128>}, {pipeline_mode = #tpu.pipeline_mode<synchronous>, transform_indices = @transform_5, window_bounds = array<i64: 128, 128>}, {pipeline_mode = #tpu.pipeline_mode<synchronous>, transform_indices = @transform_6, window_bounds = array<i64: 1, 128>}, {transform_indices = @transform_7, window_bounds = array<i64: 128, 128>}]} {
    %c0 = arith.constant 0 : index
    %c0_0 = arith.constant 0 : index
    %0 = vector.load %arg1[%c0, %c0_0] : memref<128x256xbf16, #tpu.memory_space<vmem>>, vector<128x256xbf16>
    %c0_1 = arith.constant 0 : index
    %c0_2 = arith.constant 0 : index
    %1 = vector.load %arg2[%c0_1, %c0_2] : memref<256x128xbf16, #tpu.memory_space<vmem>>, vector<256x128xbf16>
    %cst = arith.constant dense<0.000000e+00> : vector<128x128xf32>
    %2 = tpu.matmul %0, %1, %cst {dimension_numbers = #tpu.dot_dimension_numbers<[1], [0], [0], [1], [0, 0, 1, 1], [], []>} : vector<128x256xbf16>, vector<256x128xbf16>, vector<128x128xf32> -> vector<128x128xf32>
    %c0_3 = arith.constant 0 : index
    %c0_4 = arith.constant 0 : index
    %3 = vector.load %arg3[%c0_3, %c0_4] : memref<1x128xf32, #tpu.memory_space<vmem>>, vector<1x128xf32>
    %4 = vector.broadcast %3 : vector<1x128xf32> to vector<128x128xf32>
    %5 = arith.addf %2, %4 : vector<128x128xf32>
    %cst_5 = arith.constant 0.000000e+00 : f32
    %6 = vector.broadcast %cst_5 : f32 to vector<128x128xf32>
    %7 = arith.maximumf %5, %6 : vector<128x128xf32>
    %8 = arith.truncf %7 : vector<128x128xf32> to vector<128x128xbf16>
    %c0_6 = arith.constant 0 : index
    %c0_7 = arith.constant 0 : index
    %9 = vector.load %arg4[%c0_6, %c0_7] : memref<128x128xbf16, #tpu.memory_space<vmem>>, vector<128x128xbf16>
    %cst_8 = arith.constant dense<0.000000e+00> : vector<128x128xf32>
    %10 = tpu.matmul %8, %9, %cst_8 {dimension_numbers = #tpu.dot_dimension_numbers<[1], [0], [0], [1], [0, 0, 1, 1], [], []>} : vector<128x128xbf16>, vector<128x128xbf16>, vector<128x128xf32> -> vector<128x128xf32>
    %c0_9 = arith.constant 0 : index
    %c0_10 = arith.constant 0 : index
    %11 = vector.load %arg5[%c0_9, %c0_10] : memref<1x128xf32, #tpu.memory_space<vmem>>, vector<1x128xf32>
    %12 = vector.broadcast %11 : vector<1x128xf32> to vector<128x128xf32>
    %13 = arith.addf %10, %12 : vector<128x128xf32>
    %cst_11 = arith.constant 0.000000e+00 : f32
    %14 = vector.broadcast %cst_11 : f32 to vector<128x128xf32>
    %15 = arith.maximumf %13, %14 : vector<128x128xf32>
    %16 = arith.truncf %15 : vector<128x128xf32> to vector<128x128xbf16>
    %c0_12 = arith.constant 0 : index
    %c0_13 = arith.constant 0 : index
    %17 = vector.load %arg6[%c0_12, %c0_13] : memref<128x128xbf16, #tpu.memory_space<vmem>>, vector<128x128xbf16>
    %cst_14 = arith.constant dense<0.000000e+00> : vector<128x128xf32>
    %18 = tpu.matmul %16, %17, %cst_14 {dimension_numbers = #tpu.dot_dimension_numbers<[1], [0], [0], [1], [0, 0, 1, 1], [], []>} : vector<128x128xbf16>, vector<128x128xbf16>, vector<128x128xf32> -> vector<128x128xf32>
    %c0_15 = arith.constant 0 : index
    %c0_16 = arith.constant 0 : index
    %19 = vector.load %arg7[%c0_15, %c0_16] : memref<1x128xf32, #tpu.memory_space<vmem>>, vector<1x128xf32>
    %20 = vector.broadcast %19 : vector<1x128xf32> to vector<128x128xf32>
    %21 = arith.addf %18, %20 : vector<128x128xf32>
    %c0_17 = arith.constant 0 : index
    %c0_18 = arith.constant 0 : index
    %22 = vector.load %arg8[%c0_17, %c0_18] : memref<128x128xf32, #tpu.memory_space<vmem>>, vector<128x128xf32>
    tpu.vector_store %arg8[%c0_17, %c0_18], %21 {strides = array<i32>} : memref<128x128xf32, #tpu.memory_space<vmem>>, vector<128x128xf32>,
    return
  }
  func.func @transform_0(%arg0: i32) -> (i32, i32) {
    %c0_i32 = arith.constant 0 : i32
    %c0_i32_0 = arith.constant 0 : i32
    return %arg0, %c0_i32 : i32, i32
  }
  func.func @transform_1(%arg0: i32) -> (i32, i32) {
    %c0_i32 = arith.constant 0 : i32
    %c0_i32_0 = arith.constant 0 : i32
    %c0_i32_1 = arith.constant 0 : i32
    return %c0_i32, %c0_i32_0 : i32, i32
  }
  func.func @transform_2(%arg0: i32) -> (i32, i32) {
    %c0_i32 = arith.constant 0 : i32
    %c0_i32_0 = arith.constant 0 : i32
    %c0_i32_1 = arith.constant 0 : i32
    return %c0_i32, %c0_i32_0 : i32, i32
  }
  func.func @transform_3(%arg0: i32) -> (i32, i32) {
    %c0_i32 = arith.constant 0 : i32
    %c0_i32_0 = arith.constant 0 : i32
    %c0_i32_1 = arith.constant 0 : i32
    return %c0_i32, %c0_i32_0 : i32, i32
  }
  func.func @transform_4(%arg0: i32) -> (i32, i32) {
    %c0_i32 = arith.constant 0 : i32
    %c0_i32_0 = arith.constant 0 : i32
    %c0_i32_1 = arith.constant 0 : i32
    return %c0_i32, %c0_i32_0 : i32, i32
  }
  func.func @transform_5(%arg0: i32) -> (i32, i32) {
    %c0_i32 = arith.constant 0 : i32
    %c0_i32_0 = arith.constant 0 : i32
    %c0_i32_1 = arith.constant 0 : i32
    return %c0_i32, %c0_i32_0 : i32, i32
  }
  func.func @transform_6(%arg0: i32) -> (i32, i32) {
    %c0_i32 = arith.constant 0 : i32
    %c0_i32_0 = arith.constant 0 : i32
    %c0_i32_1 = arith.constant 0 : i32
    return %c0_i32, %c0_i32_0 : i32, i32
  }
  func.func @transform_7(%arg0: i32) -> (i32, i32) {
    %c0_i32 = arith.constant 0 : i32
    %c0_i32_0 = arith.constant 0 : i32
    return %arg0, %c0_i32 : i32, i32
  }
}

</mosaic_0001>

<llo_original>
// kernel: box_head_predictor.1
$region0: #{box_head_predictor.1}
  #allocation0 [shape = 'u32[]', space=smem, size = 0x4, offset = 0x4, fixed_abs, tag = 'smem constant byte address 0x4 - core index']
  #allocation1 [shape = 'u32[144,128]{1,0:T(1,128)}', space=vmem, size = 0x12000, scoped, tag = 'internal scratch']
  %s0 = inlined_call_operand.vmem [shape: bf16[384,256], index: 0, kind: input, shape index: {}]
  %s1 = inlined_call_operand.vmem [shape: bf16[256,128], index: 1, kind: input, shape index: {}]
  %s2 = inlined_call_operand.vmem [shape: f32[1,128], index: 2, kind: input, shape index: {}]
  %s3 = inlined_call_operand.vmem [shape: bf16[128,128], index: 3, kind: input, shape index: {}]
  %s4 = inlined_call_operand.vmem [shape: f32[1,128], index: 4, kind: input, shape index: {}]
  %s5 = inlined_call_operand.vmem [shape: bf16[128,128], index: 5, kind: input, shape index: {}]
  %s6 = inlined_call_operand.vmem [shape: f32[1,128], index: 6, kind: input, shape index: {}]
  %s7 = inlined_call_operand.vmem [shape: f32[384,128], index: 7, kind: output, shape index: {}]
  %s8 = sld [smem:[#allocation0]]
  $region61: #{box_head_predictor.1} parent=0
    _
  %s10 = ssub.s32 1, %s8
  %s11 = scalar_select 0, %s10, %s8
  loop: start=0, step=1, limit=5
  $region2: #{box_head_predictor.1} parent=0 // loop_pre_header
    _
  $region3: #{box_head_predictor.1} parent=0 // loop_header
    %s13 = sphi 0, %s17
    %p14 = scmp.ge.s32.totalorder %s13, 5
    %s23 = sphi 0, %s25
    %s26 = sphi 0, %s23
    %s27 = sphi 0, %s26
    %s43 = sphi 0, %s27
    %s47 = sphi 0, %s47
    %s49 = sphi 0, %s47
    %s50 = sphi 0, %s49
    %s64 = sphi 0, %s50
    %s68 = sphi 0, %s68
    %s70 = sphi 0, %s68
    %s71 = sphi 0, %s70
    %s85 = sphi 0, %s71
    %s89 = sphi 0, %s89
    %s91 = sphi 0, %s89
    %s92 = sphi 0, %s91
    %s106 = sphi 0, %s92
    %s110 = sphi 0, %s110
    %s112 = sphi 0, %s110
    %s113 = sphi 0, %s112
    %s127 = sphi 0, %s113
    %s131 = sphi 0, %s131
    %s133 = sphi 0, %s131
    %s134 = sphi 0, %s133
    %s148 = sphi 0, %s134
    %s152 = sphi 0, %s152
    %s154 = sphi 0, %s152
    %s155 = sphi 0, %s154
    %s169 = sphi 0, %s155
    %s175 = sphi 0, %s177
    %s178 = sphi 0, %s175
    %s179 = sphi 0, %s178
    %s195 = sphi 0, %s179
  $region4: #{box_head_predictor.1} parent=0 // loop_header_branch
    %16 = sbr.rel (%p14) target = $region8
  $region5: #{box_head_predictor.1} parent=0 // loop_body
    %s18 = ssub.s32 %s13, 1
    %s19 = ssub.s32 %s13, 2
    %s20 = sadd.s32 %s13, 1
    %s21 = ssub.s32 %s13, %s20
    %p22 = scmp.eq.s32.totalorder %s21, 0
    %s24 = sadd.s32 %s23, 1
    %s25 = scalar_select %p22, %s23, %s24
    %p28 = pneg %p22
    %p29 = scmp.eq.s32.totalorder %s13, 2
    %p30 = por %p28, %p29
    %p31 = scmp.ne.s32.totalorder %s23, %s26
    %p32 = scmp.eq.s32.totalorder %s13, 0
    %p33 = por %p31, %p32
    %p34 = scmp.ne.s32.totalorder %s23, %s26
    %p35 = scmp.eq.s32.totalorder %s18, 2
    %p36 = por %p34, %p35
    %p37 = scmp.ne.s32.totalorder %s26, %s27
    %p38 = scmp.eq.s32.totalorder %s18, 0
    %p39 = por %p37, %p38
    %p40 = scmp.ne.s32.totalorder %s26, %s27
    %p41 = scmp.eq.s32.totalorder %s19, 2
    %p42 = por %p40, %p41
    %p44 = scmp.ne.s32.totalorder %s27, %s43
    %p45 = scmp.eq.s32.totalorder %s19, 0
    %p46 = por %p44, %p45
    %s48 = sadd.s32 %s47, 1
    %p51 = scmp.eq.s32.totalorder %s13, 2
    %p52 = scmp.ne.s32.totalorder %s47, %s49
    %p53 = scmp.eq.s32.totalorder %s13, 0
    %p54 = por %p52, %p53
    %p55 = scmp.ne.s32.totalorder %s47, %s49
    %p56 = scmp.eq.s32.totalorder %s18, 2
    %p57 = por %p55, %p56
    %p58 = scmp.ne.s32.totalorder %s49, %s50
    %p59 = scmp.eq.s32.totalorder %s18, 0
    %p60 = por %p58, %p59
    %p61 = scmp.ne.s32.totalorder %s49, %s50
    %p62 = scmp.eq.s32.totalorder %s19, 2
    %p63 = por %p61, %p62
    %p65 = scmp.ne.s32.totalorder %s50, %s64
    %p66 = scmp.eq.s32.totalorder %s19, 0
    %p67 = por %p65, %p66
    %s69 = sadd.s32 %s68, 1
    %p72 = scmp.eq.s32.totalorder %s13, 2
    %p73 = scmp.ne.s32.totalorder %s68, %s70
    %p74 = scmp.eq.s32.totalorder %s13, 0
    %p75 = por %p73, %p74
    %p76 = scmp.ne.s32.totalorder %s68, %s70
    %p77 = scmp.eq.s32.totalorder %s18, 2
    %p78 = por %p76, %p77
    %p79 = scmp.ne.s32.totalorder %s70, %s71
    %p80 = scmp.eq.s32.totalorder %s18, 0
    %p81 = por %p79, %p80
    %p82 = scmp.ne.s32.totalorder %s70, %s71
    %p83 = scmp.eq.s32.totalorder %s19, 2
    %p84 = por %p82, %p83
    %p86 = scmp.ne.s32.totalorder %s71, %s85
    %p87 = scmp.eq.s32.totalorder %s19, 0
    %p88 = por %p86, %p87
    %s90 = sadd.s32 %s89, 1
    %p93 = scmp.eq.s32.totalorder %s13, 2
    %p94 = scmp.ne.s32.totalorder %s89, %s91
    %p95 = scmp.eq.s32.totalorder %s13, 0
    %p96 = por %p94, %p95
    %p97 = scmp.ne.s32.totalorder %s89, %s91
    %p98 = scmp.eq.s32.totalorder %s18, 2
    %p99 = por %p97, %p98
    %p100 = scmp.ne.s32.totalorder %s91, %s92
    %p101 = scmp.eq.s32.totalorder %s18, 0
    %p102 = por %p100, %p101
    %p103 = scmp.ne.s32.totalorder %s91, %s92
    %p104 = scmp.eq.s32.totalorder %s19, 2
    %p105 = por %p103, %p104
    %p107 = scmp.ne.s32.totalorder %s92, %s106
    %p108 = scmp.eq.s32.totalorder %s19, 0
    %p109 = por %p107, %p108
    %s111 = sadd.s32 %s110, 1
    %p114 = scmp.eq.s32.totalorder %s13, 2
    %p115 = scmp.ne.s32.totalorder %s110, %s112
    %p116 = scmp.eq.s32.totalorder %s13, 0
    %p117 = por %p115, %p116
    %p118 = scmp.ne.s32.totalorder %s110, %s112
    %p119 = scmp.eq.s32.totalorder %s18, 2
    %p120 = por %p118, %p119
    %p121 = scmp.ne.s32.totalorder %s112, %s113
    %p122 = scmp.eq.s32.totalorder %s18, 0
    %p123 = por %p121, %p122
    %p124 = scmp.ne.s32.totalorder %s112, %s113
    %p125 = scmp.eq.s32.totalorder %s19, 2
    %p126 = por %p124, %p125
    %p128 = scmp.ne.s32.totalorder %s113, %s127
    %p129 = scmp.eq.s32.totalorder %s19, 0
    %p130 = por %p128, %p129
    %s132 = sadd.s32 %s131, 1
    %p135 = scmp.eq.s32.totalorder %s13, 2
    %p136 = scmp.ne.s32.totalorder %s131, %s133
    %p137 = scmp.eq.s32.totalorder %s13, 0
    %p138 = por %p136, %p137
    %p139 = scmp.ne.s32.totalorder %s131, %s133
    %p140 = scmp.eq.s32.totalorder %s18, 2
    %p141 = por %p139, %p140
    %p142 = scmp.ne.s32.totalorder %s133, %s134
    %p143 = scmp.eq.s32.totalorder %s18, 0
    %p144 = por %p142, %p143
    %p145 = scmp.ne.s32.totalorder %s133, %s134
    %p146 = scmp.eq.s32.totalorder %s19, 2
    %p147 = por %p145, %p146
    %p149 = scmp.ne.s32.totalorder %s134, %s148
    %p150 = scmp.eq.s32.totalorder %s19, 0
    %p151 = por %p149, %p150
    %s153 = sadd.s32 %s152, 1
    %p156 = scmp.eq.s32.totalorder %s13, 2
    %p157 = scmp.ne.s32.totalorder %s152, %s154
    %p158 = scmp.eq.s32.totalorder %s13, 0
    %p159 = por %p157, %p158
    %p160 = scmp.ne.s32.totalorder %s152, %s154
    %p161 = scmp.eq.s32.totalorder %s18, 2
    %p162 = por %p160, %p161
    %p163 = scmp.ne.s32.totalorder %s154, %s155
    %p164 = scmp.eq.s32.totalorder %s18, 0
    %p165 = por %p163, %p164
    %p166 = scmp.ne.s32.totalorder %s154, %s155
    %p167 = scmp.eq.s32.totalorder %s19, 2
    %p168 = por %p166, %p167
    %p170 = scmp.ne.s32.totalorder %s155, %s169
    %p171 = scmp.eq.s32.totalorder %s19, 0
    %p172 = por %p170, %p171
    %s173 = ssub.s32 %s13, %s20
    %p174 = scmp.eq.s32.totalorder %s173, 0
    %s176 = sadd.s32 %s175, 1
    %s177 = scalar_select %p174, %s175, %s176
    %p180 = pneg %p174
    %p181 = scmp.eq.s32.totalorder %s13, 2
    %p182 = por %p180, %p181
    %p183 = scmp.ne.s32.totalorder %s175, %s178
    %p184 = scmp.eq.s32.totalorder %s13, 0
    %p185 = por %p183, %p184
    %p186 = scmp.ne.s32.totalorder %s175, %s178
    %p187 = scmp.eq.s32.totalorder %s18, 2
    %p188 = por %p186, %p187
    %p189 = scmp.ne.s32.totalorder %s178, %s179
    %p190 = scmp.eq.s32.totalorder %s18, 0
    %p191 = por %p189, %p190
    %p192 = scmp.ne.s32.totalorder %s178, %s179
    %p193 = scmp.eq.s32.totalorder %s19, 2
    %p194 = por %p192, %p193
    %p196 = scmp.ne.s32.totalorder %s179, %s195
    %p197 = scmp.eq.s32.totalorder %s19, 0
    %p198 = por %p196, %p197
    %p199 = scmp.le.s32.totalorder 1, %s13
    %p200 = scmp.lt.s32.totalorder %s13, 4
    %p201 = pnand %p199, %p200
    %p202 = pneg %p201
    // Predicated region
    $region9: #{box_head_predictor.1} parent=5 // pred_check
      _
    $region10: #{box_head_predictor.1} parent=5 // pred_check_branch
      %204 = sbr.rel (%p201) target = $region12
    $region11: #{box_head_predictor.1} parent=5 // pred_region
      %s205 = ssub.s32 %s13, 1
      // Predicated region
      $region13: #{box_head_predictor.1} parent=11 // pred_check
        %p206 = pneg %p60
      $region14: #{box_head_predictor.1} parent=11 // pred_check_branch
        %208 = sbr.rel (%p206) target = $region16
      $region15: #{box_head_predictor.1} parent=11 // pred_region
        _
      $region16: #{box_head_predictor.1} parent=11 // pred_fallthru
        _
      // Predicated region
      $region17: #{box_head_predictor.1} parent=11 // pred_check
        %p209 = pneg %p81
      $region18: #{box_head_predictor.1} parent=11 // pred_check_branch
        %211 = sbr.rel (%p209) target = $region20
      $region19: #{box_head_predictor.1} parent=11 // pred_region
        _
      $region20: #{box_head_predictor.1} parent=11 // pred_fallthru
        _
      // Predicated region
      $region21: #{box_head_predictor.1} parent=11 // pred_check
        %p212 = pneg %p102
      $region22: #{box_head_predictor.1} parent=11 // pred_check_branch
        %214 = sbr.rel (%p212) target = $region24
      $region23: #{box_head_predictor.1} parent=11 // pred_region
        _
      $region24: #{box_head_predictor.1} parent=11 // pred_fallthru
        _
      // Predicated region
      $region25: #{box_head_predictor.1} parent=11 // pred_check
        %p215 = pneg %p123
      $region26: #{box_head_predictor.1} parent=11 // pred_check_branch
        %217 = sbr.rel (%p215) target = $region28
      $region27: #{box_head_predictor.1} parent=11 // pred_region
        _
      $region28: #{box_head_predictor.1} parent=11 // pred_fallthru
        _
      // Predicated region
      $region29: #{box_head_predictor.1} parent=11 // pred_check
        %p218 = pneg %p144
      $region30: #{box_head_predictor.1} parent=11 // pred_check_branch
        %220 = sbr.rel (%p218) target = $region32
      $region31: #{box_head_predictor.1} parent=11 // pred_region
        _
      $region32: #{box_head_predictor.1} parent=11 // pred_fallthru
        _
      // Predicated region
      $region33: #{box_head_predictor.1} parent=11 // pred_check
        %p221 = pneg %p165
      $region34: #{box_head_predictor.1} parent=11 // pred_check_branch
        %223 = sbr.rel (%p221) target = $region36
      $region35: #{box_head_predictor.1} parent=11 // pred_region
        _
      $region36: #{box_head_predictor.1} parent=11 // pred_fallthru
        _
    $region12: #{box_head_predictor.1} parent=5 // pred_fallthru
      _
    %p224 = scmp.lt.s32.totalorder %s13, 3
    // Predicated region
    $region37: #{box_head_predictor.1} parent=5 // pred_check
      %p225 = pneg %p224
    $region38: #{box_head_predictor.1} parent=5 // pred_check_branch
      %227 = sbr.rel (%p225) target = $region40
    $region39: #{box_head_predictor.1} parent=5 // pred_region
      // Predicated region
      $region41: #{box_head_predictor.1} parent=39 // pred_check
        %p228 = pneg %p33
      $region42: #{box_head_predictor.1} parent=39 // pred_check_branch
        %230 = sbr.rel (%p228) target = $region44
      $region43: #{box_head_predictor.1} parent=39 // pred_region
        %s231 = smul.u32 16, %s13
        %p232 = scmp.lt.s32.totalorder %s231, 47
        %s233 = scalar_select %p232, %s231, 47
        %s234 = smul.addr %s233, 2
        %s235 = smul.addr %s234, 4
        %s236 = scalar_lea.vmem %s0, %s235
        %s237 = smul.u32 16, %s13
      $region44: #{box_head_predictor.1} parent=39 // pred_fallthru
        _
    $region40: #{box_head_predictor.1} parent=5 // pred_fallthru
      _
    %p238 = scmp.le.s32.totalorder 1, %s13
    %p239 = scmp.lt.s32.totalorder %s13, 4
    %p240 = pnand %p238, %p239
    %p241 = pneg %p240
    // Predicated region
    $region45: #{box_head_predictor.1} parent=5 // pred_check
      _
    $region46: #{box_head_predictor.1} parent=5 // pred_check_branch
      %243 = sbr.rel (%p240) target = $region48
    $region47: #{box_head_predictor.1} parent=5 // pred_region
      %s244 = ssub.s32 %s13, 1
      %s245 = smul.u32 16, %s18
      %p246 = scmp.lt.s32.totalorder %s245, 47
      %s247 = scalar_select %p246, %s245, 47
      %s248 = smul.addr %s247, 2
      %s249 = smul.addr %s248, 4
      %s250 = scalar_lea.vmem %s0, %s249
      %p251 = pneg %p39
      %p252 = pneg %p36
      %p253 = pneg %p60
      %p254 = pneg %p57
      %p255 = pneg %p81
      %p256 = pneg %p78
      %p257 = pneg %p102
      %p258 = pneg %p99
      %p259 = pneg %p123
      %p260 = pneg %p120
      %p261 = pneg %p144
      %p262 = pneg %p141
      %p263 = pneg %p165
      %p264 = pneg %p162
      %p265 = pneg %p191
      %p266 = pneg %p188
      %s267 = smul.u32 16, %s18
      %p268 = scmp.lt.s32.totalorder %s267, 47
      %s269 = scalar_select %p268, %s267, 47
      %s270 = smul.addr %s269, 8
      %s271 = scalar_lea.vmem %s7, %s270
      %s272 = smul.u32 16, %s18
      %p273 = scmp.lt.s32.totalorder %s272, 47
      %s274 = scalar_select %p273, %s272, 47
      %s275 = smul.addr %s274, 2
      %s276 = smul.addr %s275, 4
      %s277 = scalar_lea.vmem %s0, %s276
      %s278 = smul.u32 16, %s18
      %s279 = smul.u32 16, %s18
      %p280 = scmp.lt.s32.totalorder %s279, 47
      %s281 = scalar_select %p280, %s279, 47
      %s282 = smul.addr %s281, 8
      %s283 = scalar_lea.vmem %s7, %s282
      %s284 = smul.u32 16, %s18
      %v286 = vld [vmem:[%s277] sm:$0xff]
      %v287 = vld [vmem:[%s277 + $0x8] sm:$0xff]
      %v288 = vld [vmem:[%s277 + $0x10] sm:$0xff]
      %v289 = vld [vmem:[%s277 + $0x18] sm:$0xff]
      %v290 = vld [vmem:[%s277 + $0x20] sm:$0xff]
      %v291 = vld [vmem:[%s277 + $0x28] sm:$0xff]
      %v292 = vld [vmem:[%s277 + $0x30] sm:$0xff]
      %v293 = vld [vmem:[%s277 + $0x38] sm:$0xff]
      %v294 = vld [vmem:[%s277 + $0x40] sm:$0xff]
      %v295 = vld [vmem:[%s277 + $0x48] sm:$0xff]
      %v296 = vld [vmem:[%s277 + $0x50] sm:$0xff]
      %v297 = vld [vmem:[%s277 + $0x58] sm:$0xff]
      %v298 = vld [vmem:[%s277 + $0x60] sm:$0xff]
      %v299 = vld [vmem:[%s277 + $0x68] sm:$0xff]
      %v300 = vld [vmem:[%s277 + $0x70] sm:$0xff]
      %v301 = vld [vmem:[%s277 + $0x78] sm:$0xff]
      %v302 = vld [vmem:[%s1] sm:$0xf]
      %v303 = vld [vmem:[%s1 + $0x4] sm:$0xf]
      %v304 = vld [vmem:[%s1 + $0x8] sm:$0xf]
      %v305 = vld [vmem:[%s1 + $0xc] sm:$0xf]
      %v306 = vld [vmem:[%s1 + $0x10] sm:$0xf]
      %v307 = vld [vmem:[%s1 + $0x14] sm:$0xf]
      %v308 = vld [vmem:[%s1 + $0x18] sm:$0xf]
      %v309 = vld [vmem:[%s1 + $0x1c] sm:$0xf]
      %v310 = vld [vmem:[%s1 + $0x20] sm:$0xf]
      %v311 = vld [vmem:[%s1 + $0x24] sm:$0xf]
      %v312 = vld [vmem:[%s1 + $0x28] sm:$0xf]
      %v313 = vld [vmem:[%s1 + $0x2c] sm:$0xf]
      %v314 = vld [vmem:[%s1 + $0x30] sm:$0xf]
      %v315 = vld [vmem:[%s1 + $0x34] sm:$0xf]
      %v316 = vld [vmem:[%s1 + $0x38] sm:$0xf]
      %v317 = vld [vmem:[%s1 + $0x3c] sm:$0xf]
      %v318 = vld [vmem:[%s1 + $0x40] sm:$0xf]
      %v319 = vld [vmem:[%s1 + $0x44] sm:$0xf]
      %v320 = vld [vmem:[%s1 + $0x48] sm:$0xf]
      %v321 = vld [vmem:[%s1 + $0x4c] sm:$0xf]
      %v322 = vld [vmem:[%s1 + $0x50] sm:$0xf]
      %v323 = vld [vmem:[%s1 + $0x54] sm:$0xf]
      %v324 = vld [vmem:[%s1 + $0x58] sm:$0xf]
      %v325 = vld [vmem:[%s1 + $0x5c] sm:$0xf]
      %v326 = vld [vmem:[%s1 + $0x60] sm:$0xf]
      %v327 = vld [vmem:[%s1 + $0x64] sm:$0xf]
      %v328 = vld [vmem:[%s1 + $0x68] sm:$0xf]
      %v329 = vld [vmem:[%s1 + $0x6c] sm:$0xf]
      %v330 = vld [vmem:[%s1 + $0x70] sm:$0xf]
      %v331 = vld [vmem:[%s1 + $0x74] sm:$0xf]
      %v332 = vld [vmem:[%s1 + $0x78] sm:$0xf]
      %v333 = vld [vmem:[%s1 + $0x7c] sm:$0xf]
      %v334 = vld [vmem:[%s2] sm:$0x1]
      %v336 = vlaneseq
      %v337 = vshrl.u32 %v336, 7
      %v338 = vsub.s32 0, %v337
      %v339 = vrot.slane %v334, %v338
      %v357 = vunpack.c.l.b16 %v286
      %v358 = vunpack.c.h.b16 %v286
      %v359 = vunpack.c.l.b16 %v287
      %v360 = vunpack.c.h.b16 %v287
      %v361 = vunpack.c.l.b16 %v288
      %v362 = vunpack.c.h.b16 %v288
      %v363 = vunpack.c.l.b16 %v289
      %v364 = vunpack.c.h.b16 %v289
      %v365 = vunpack.c.l.b16 %v290
      %v366 = vunpack.c.h.b16 %v290
      %v367 = vunpack.c.l.b16 %v291
      %v368 = vunpack.c.h.b16 %v291
      %v369 = vunpack.c.l.b16 %v292
      %v370 = vunpack.c.h.b16 %v292
      %v371 = vunpack.c.l.b16 %v293
      %v372 = vunpack.c.h.b16 %v293
      %v373 = vunpack.c.l.b16 %v294
      %v374 = vunpack.c.h.b16 %v294
      %v375 = vunpack.c.l.b16 %v295
      %v376 = vunpack.c.h.b16 %v295
      %v377 = vunpack.c.l.b16 %v296
      %v378 = vunpack.c.h.b16 %v296
      %v379 = vunpack.c.l.b16 %v297
      %v380 = vunpack.c.h.b16 %v297
      %v381 = vunpack.c.l.b16 %v298
      %v382 = vunpack.c.h.b16 %v298
      %v383 = vunpack.c.l.b16 %v299
      %v384 = vunpack.c.h.b16 %v299
      %v385 = vunpack.c.l.b16 %v300
      %v386 = vunpack.c.h.b16 %v300
      %v387 = vunpack.c.l.b16 %v301
      %v388 = vunpack.c.h.b16 %v301
      %v389 = vpack.c.b16 %v359, %v357
      %v390 = vpack.c.b16 %v360, %v358
      %v391 = vpack.c.b16 %v363, %v361
      %v392 = vpack.c.b16 %v364, %v362
      %v393 = vpack.c.b16 %v367, %v365
      %v394 = vpack.c.b16 %v368, %v366
      %v395 = vpack.c.b16 %v371, %v369
      %v396 = vpack.c.b16 %v372, %v370
      %v397 = vpack.c.b16 %v375, %v373
      %v398 = vpack.c.b16 %v376, %v374
      %v399 = vpack.c.b16 %v379, %v377
      %v400 = vpack.c.b16 %v380, %v378
      %v401 = vpack.c.b16 %v383, %v381
      %v402 = vpack.c.b16 %v384, %v382
      %v403 = vpack.c.b16 %v387, %v385
      %v404 = vpack.c.b16 %v388, %v386
      %v453 = vunpack.c.l.b16 %v302
      %v454 = vunpack.c.l.b16 %v303
      %v455 = vunpack.c.l.b16 %v304
      %v456 = vunpack.c.l.b16 %v305
      %v457 = vunpack.c.l.b16 %v306
      %v458 = vunpack.c.l.b16 %v307
      %v459 = vunpack.c.l.b16 %v308
      %v460 = vunpack.c.l.b16 %v309
      %v461 = vunpack.c.l.b16 %v310
      %v462 = vunpack.c.l.b16 %v311
      %v463 = vunpack.c.l.b16 %v312
      %v464 = vunpack.c.l.b16 %v313
      %v465 = vunpack.c.l.b16 %v314
      %v466 = vunpack.c.l.b16 %v315
      %v467 = vunpack.c.l.b16 %v316
      %v468 = vunpack.c.l.b16 %v317
      %v469 = vunpack.c.l.b16 %v318
      %v470 = vunpack.c.l.b16 %v319
      %v471 = vunpack.c.l.b16 %v320
      %v472 = vunpack.c.l.b16 %v321
      %v473 = vunpack.c.l.b16 %v322
      %v474 = vunpack.c.l.b16 %v323
      %v475 = vunpack.c.l.b16 %v324
      %v476 = vunpack.c.l.b16 %v325
      %v477 = vunpack.c.l.b16 %v326
      %v478 = vunpack.c.l.b16 %v327
      %v479 = vunpack.c.l.b16 %v328
      %v480 = vunpack.c.l.b16 %v329
      %v481 = vunpack.c.l.b16 %v330
      %v482 = vunpack.c.l.b16 %v331
      %v483 = vunpack.c.l.b16 %v332
      %v484 = vunpack.c.l.b16 %v333
      %v485 = vpack.c.b16 %v454, %v453
      %v486 = vpack.c.b16 %v456, %v455
      %v487 = vpack.c.b16 %v458, %v457
      %v488 = vpack.c.b16 %v460, %v459
      %v489 = vpack.c.b16 %v462, %v461
      %v490 = vpack.c.b16 %v464, %v463
      %v491 = vpack.c.b16 %v466, %v465
      %v492 = vpack.c.b16 %v468, %v467
      %v493 = vpack.c.b16 %v470, %v469
      %v494 = vpack.c.b16 %v472, %v471
      %v495 = vpack.c.b16 %v474, %v473
      %v496 = vpack.c.b16 %v476, %v475
      %v497 = vpack.c.b16 %v478, %v477
      %v498 = vpack.c.b16 %v480, %v479
      %v499 = vpack.c.b16 %v482, %v481
      %v500 = vpack.c.b16 %v484, %v483
      %517 = vmatprep.subr.bf16.mxu0 0
      %518 = vmatpush1.bf16.msra.mxu0 %v492
      %519 = vmatprep.subr.bf16.mxu0 0
      %520 = vmatpush1.bf16.msra.mxu0 %v491
      %521 = vmatprep.subr.bf16.mxu0 0
      %522 = vmatpush1.bf16.msra.mxu0 %v490
      %523 = vmatprep.subr.bf16.mxu0 0
      %524 = vmatpush1.bf16.msra.mxu0 %v489
      %525 = vmatprep.subr.bf16.mxu0 0
      %526 = vmatpush1.bf16.msra.mxu0 %v488
      %527 = vmatprep.subr.bf16.mxu0 0
      %528 = vmatpush1.bf16.msra.mxu0 %v487
      %529 = vmatprep.subr.bf16.mxu0 0
      %530 = vmatpush1.bf16.msra.mxu0 %v486
      %531 = vmatprep.subr.bf16.mxu0 0
      %532 = vmatpush1.bf16.msra.mxu0 %v485
      %533 = vmatprep.subr.bf16.mxu0 0
      %534 = vmatpush2.bf16.msra.mxu0 %v500
      %535 = vmatprep.subr.bf16.mxu0 0
      %536 = vmatpush2.bf16.msra.mxu0 %v499
      %537 = vmatprep.subr.bf16.mxu0 0
      %538 = vmatpush2.bf16.msra.mxu0 %v498
      %539 = vmatprep.subr.bf16.mxu0 0
      %540 = vmatpush2.bf16.msra.mxu0 %v497
      %541 = vmatprep.subr.bf16.mxu0 0
      %542 = vmatpush2.bf16.msra.mxu0 %v496
      %543 = vmatprep.subr.bf16.mxu0 0
      %544 = vmatpush2.bf16.msra.mxu0 %v495
      %545 = vmatprep.subr.bf16.mxu0 0
      %546 = vmatpush2.bf16.msra.mxu0 %v494
      %547 = vmatprep.subr.bf16.mxu0 0
      %548 = vmatpush2.bf16.msra.mxu0 %v493
      %549 = vmatprep.mubr.bf16.mxu0 %v390
      %550 = vmatmul.mubr.bf16.gmra.mxu0 %v389
      %v551 = vpop.f32.mrf.mxu0
      %v552 = vadd.f32 %v339, %v551
      %v553 = vpop.f32.mrf.mxu0
      %v554 = vpop.f32.mrf.mxu0
      %v555 = vadd.f32 %v339, %v554
      %v556 = vpop.f32.mrf.mxu0
      %557 = vmatprep.mubr.bf16.mxu0 %v392
      %558 = vmatmul.mubr.bf16.gmra.mxu0 %v391
      %v559 = vpop.f32.mrf.mxu0
      %v560 = vadd.f32 %v339, %v559
      %v561 = vpop.f32.mrf.mxu0
      %v562 = vpop.f32.mrf.mxu0
      %v563 = vadd.f32 %v339, %v562
      %v564 = vpop.f32.mrf.mxu0
      %565 = vmatprep.mubr.bf16.mxu0 %v394
      %566 = vmatmul.mubr.bf16.gmra.mxu0 %v393
      %v567 = vpop.f32.mrf.mxu0
      %v568 = vadd.f32 %v339, %v567
      %v569 = vpop.f32.mrf.mxu0
      %v570 = vpop.f32.mrf.mxu0
      %v571 = vadd.f32 %v339, %v570
      %v572 = vpop.f32.mrf.mxu0
      %573 = vmatprep.mubr.bf16.mxu0 %v396
      %574 = vmatmul.mubr.bf16.gmra.mxu0 %v395
      %v575 = vpop.f32.mrf.mxu0
      %v576 = vadd.f32 %v339, %v575
      %v577 = vpop.f32.mrf.mxu0
      %v578 = vpop.f32.mrf.mxu0
      %v579 = vadd.f32 %v339, %v578
      %v580 = vpop.f32.mrf.mxu0
      %581 = vmatprep.mubr.bf16.mxu0 %v398
      %582 = vmatmul.mubr.bf16.gmra.mxu0 %v397
      %v583 = vpop.f32.mrf.mxu0
      %v584 = vadd.f32 %v339, %v583
      %v585 = vpop.f32.mrf.mxu0
      %v586 = vpop.f32.mrf.mxu0
      %v587 = vadd.f32 %v339, %v586
      %v588 = vpop.f32.mrf.mxu0
      %589 = vmatprep.mubr.bf16.mxu0 %v400
      %590 = vmatmul.mubr.bf16.gmra.mxu0 %v399
      %v591 = vpop.f32.mrf.mxu0
      %v592 = vadd.f32 %v339, %v591
      %v593 = vpop.f32.mrf.mxu0
      %v594 = vpop.f32.mrf.mxu0
      %v595 = vadd.f32 %v339, %v594
      %v596 = vpop.f32.mrf.mxu0
      %597 = vmatprep.mubr.bf16.mxu0 %v402
      %598 = vmatmul.mubr.bf16.gmra.mxu0 %v401
      %v599 = vpop.f32.mrf.mxu0
      %v600 = vadd.f32 %v339, %v599
      %v601 = vpop.f32.mrf.mxu0
      %v602 = vpop.f32.mrf.mxu0
      %v603 = vadd.f32 %v339, %v602
      %v604 = vpop.f32.mrf.mxu0
      %605 = vmatprep.mubr.bf16.mxu0 %v404
      %606 = vmatmul.mubr.bf16.gmra.mxu0 %v403
      %v607 = vpop.f32.mrf.mxu0
      %v608 = vadd.f32 %v339, %v607
      %v609 = vpop.f32.mrf.mxu0
      %v610 = vpop.f32.mrf.mxu0
      %v611 = vadd.f32 %v339, %v610
      %v612 = vpop.f32.mrf.mxu0
      %613 = vdwg.mxu0
      %v614 = vmax.f32 %v552, 0.0
      %v615 = vmax.f32 %v555, 0.0
      %v616 = vmax.f32 %v560, 0.0
      %v617 = vmax.f32 %v563, 0.0
      %v618 = vmax.f32 %v568, 0.0
      %v619 = vmax.f32 %v571, 0.0
      %v620 = vmax.f32 %v576, 0.0
      %v621 = vmax.f32 %v579, 0.0
      %v622 = vmax.f32 %v584, 0.0
      %v623 = vmax.f32 %v587, 0.0
      %v624 = vmax.f32 %v592, 0.0
      %v625 = vmax.f32 %v595, 0.0
      %v626 = vmax.f32 %v600, 0.0
      %v627 = vmax.f32 %v603, 0.0
      %v628 = vmax.f32 %v608, 0.0
      %v629 = vmax.f32 %v611, 0.0
      %v630 = vpack.c.bf16 %v615, %v614
      %v631 = vpack.c.bf16 %v617, %v616
      %v632 = vpack.c.bf16 %v619, %v618
      %v633 = vpack.c.bf16 %v621, %v620
      %v634 = vpack.c.bf16 %v623, %v622
      %v635 = vpack.c.bf16 %v625, %v624
      %v636 = vpack.c.bf16 %v627, %v626
      %v637 = vpack.c.bf16 %v629, %v628
      %v638 = vld [vmem:[%s3] sm:$0xf]
      %v639 = vld [vmem:[%s3 + $0x4] sm:$0xf]
      %v640 = vld [vmem:[%s3 + $0x8] sm:$0xf]
      %v641 = vld [vmem:[%s3 + $0xc] sm:$0xf]
      %v642 = vld [vmem:[%s3 + $0x10] sm:$0xf]
      %v643 = vld [vmem:[%s3 + $0x14] sm:$0xf]
      %v644 = vld [vmem:[%s3 + $0x18] sm:$0xf]
      %v645 = vld [vmem:[%s3 + $0x1c] sm:$0xf]
      %v646 = vld [vmem:[%s3 + $0x20] sm:$0xf]
      %v647 = vld [vmem:[%s3 + $0x24] sm:$0xf]
      %v648 = vld [vmem:[%s3 + $0x28] sm:$0xf]
      %v649 = vld [vmem:[%s3 + $0x2c] sm:$0xf]
      %v650 = vld [vmem:[%s3 + $0x30] sm:$0xf]
      %v651 = vld [vmem:[%s3 + $0x34] sm:$0xf]
      %v652 = vld [vmem:[%s3 + $0x38] sm:$0xf]
      %v653 = vld [vmem:[%s3 + $0x3c] sm:$0xf]
      %v654 = vld [vmem:[%s4] sm:$0x1]
      %v656 = vlaneseq
      %v657 = vshrl.u32 %v656, 7
      %v658 = vsub.s32 0, %v657
      %v659 = vrot.slane %v654, %v658
      %v677 = vunpack.c.l.b16 %v638
      %v678 = vunpack.c.l.b16 %v639
      %v679 = vunpack.c.l.b16 %v640
      %v680 = vunpack.c.l.b16 %v641
      %v681 = vunpack.c.l.b16 %v642
      %v682 = vunpack.c.l.b16 %v643
      %v683 = vunpack.c.l.b16 %v644
      %v684 = vunpack.c.l.b16 %v645
      %v685 = vunpack.c.l.b16 %v646
      %v686 = vunpack.c.l.b16 %v647
      %v687 = vunpack.c.l.b16 %v648
      %v688 = vunpack.c.l.b16 %v649
      %v689 = vunpack.c.l.b16 %v650
      %v690 = vunpack.c.l.b16 %v651
      %v691 = vunpack.c.l.b16 %v652
      %v692 = vunpack.c.l.b16 %v653
      %v693 = vpack.c.b16 %v678, %v677
      %v694 = vpack.c.b16 %v680, %v679
      %v695 = vpack.c.b16 %v682, %v681
      %v696 = vpack.c.b16 %v684, %v683
      %v697 = vpack.c.b16 %v686, %v685
      %v698 = vpack.c.b16 %v688, %v687
      %v699 = vpack.c.b16 %v690, %v689
      %v700 = vpack.c.b16 %v692, %v691
      %709 = vmatprep.subr.bf16.mxu0 0
      %710 = vmatpush1.bf16.msra.mxu0 %v700
      %711 = vmatprep.subr.bf16.mxu0 0
      %712 = vmatpush1.bf16.msra.mxu0 %v699
      %713 = vmatprep.subr.bf16.mxu0 0
      %714 = vmatpush1.bf16.msra.mxu0 %v698
      %715 = vmatprep.subr.bf16.mxu0 0
      %716 = vmatpush1.bf16.msra.mxu0 %v697
      %717 = vmatprep.subr.bf16.mxu0 0
      %718 = vmatpush1.bf16.msra.mxu0 %v696
      %719 = vmatprep.subr.bf16.mxu0 0
      %720 = vmatpush1.bf16.msra.mxu0 %v695
      %721 = vmatprep.subr.bf16.mxu0 0
      %722 = vmatpush1.bf16.msra.mxu0 %v694
      %723 = vmatprep.subr.bf16.mxu0 0
      %724 = vmatpush1.bf16.msra.mxu0 %v693
      %725 = vmatprep.subr.bf16.mxu0 0
      %726 = vmatpush2.bf16.msra.mxu0 0
      %727 = vmatprep.subr.bf16.mxu0 0
      %728 = vmatpush2.bf16.msra.mxu0 0
      %729 = vmatprep.subr.bf16.mxu0 0
      %730 = vmatpush2.bf16.msra.mxu0 0
      %731 = vmatprep.subr.bf16.mxu0 0
      %732 = vmatpush2.bf16.msra.mxu0 0
      %733 = vmatprep.subr.bf16.mxu0 0
      %734 = vmatpush2.bf16.msra.mxu0 0
      %735 = vmatprep.subr.bf16.mxu0 0
      %736 = vmatpush2.bf16.msra.mxu0 0
      %737 = vmatprep.subr.bf16.mxu0 0
      %738 = vmatpush2.bf16.msra.mxu0 0
      %739 = vmatprep.subr.bf16.mxu0 0
      %740 = vmatpush2.bf16.msra.mxu0 0
      %741 = vmatprep.mubr.bf16.mxu0 0
      %742 = vmatmul.mubr.bf16.gmra.mxu0 %v630
      %v743 = vpop.f32.mrf.mxu0
      %v744 = vadd.f32 %v659, %v743
      %v745 = vpop.f32.mrf.mxu0
      %v746 = vpop.f32.mrf.mxu0
      %v747 = vadd.f32 %v659, %v746
      %v748 = vpop.f32.mrf.mxu0
      %749 = vmatprep.mubr.bf16.mxu0 0
      %750 = vmatmul.mubr.bf16.gmra.mxu0 %v631
      %v751 = vpop.f32.mrf.mxu0
      %v752 = vadd.f32 %v659, %v751
      %v753 = vpop.f32.mrf.mxu0
      %v754 = vpop.f32.mrf.mxu0
      %v755 = vadd.f32 %v659, %v754
      %v756 = vpop.f32.mrf.mxu0
      %757 = vmatprep.mubr.bf16.mxu0 0
      %758 = vmatmul.mubr.bf16.gmra.mxu0 %v632
      %v759 = vpop.f32.mrf.mxu0
      %v760 = vadd.f32 %v659, %v759
      %v761 = vpop.f32.mrf.mxu0
      %v762 = vpop.f32.mrf.mxu0
      %v763 = vadd.f32 %v659, %v762
      %v764 = vpop.f32.mrf.mxu0
      %765 = vmatprep.mubr.bf16.mxu0 0
      %766 = vmatmul.mubr.bf16.gmra.mxu0 %v633
      %v767 = vpop.f32.mrf.mxu0
      %v768 = vadd.f32 %v659, %v767
      %v769 = vpop.f32.mrf.mxu0
      %v770 = vpop.f32.mrf.mxu0
      %v771 = vadd.f32 %v659, %v770
      %v772 = vpop.f32.mrf.mxu0
      %773 = vmatprep.mubr.bf16.mxu0 0
      %774 = vmatmul.mubr.bf16.gmra.mxu0 %v634
      %v775 = vpop.f32.mrf.mxu0
      %v776 = vadd.f32 %v659, %v775
      %v777 = vpop.f32.mrf.mxu0
      %v778 = vpop.f32.mrf.mxu0
      %v779 = vadd.f32 %v659, %v778
      %v780 = vpop.f32.mrf.mxu0
      %781 = vmatprep.mubr.bf16.mxu0 0
      %782 = vmatmul.mubr.bf16.gmra.mxu0 %v635
      %v783 = vpop.f32.mrf.mxu0
      %v784 = vadd.f32 %v659, %v783
      %v785 = vpop.f32.mrf.mxu0
      %v786 = vpop.f32.mrf.mxu0
      %v787 = vadd.f32 %v659, %v786
      %v788 = vpop.f32.mrf.mxu0
      %789 = vmatprep.mubr.bf16.mxu0 0
      %790 = vmatmul.mubr.bf16.gmra.mxu0 %v636
      %v791 = vpop.f32.mrf.mxu0
      %v792 = vadd.f32 %v659, %v791
      %v793 = vpop.f32.mrf.mxu0
      %v794 = vpop.f32.mrf.mxu0
      %v795 = vadd.f32 %v659, %v794
      %v796 = vpop.f32.mrf.mxu0
      %797 = vmatprep.mubr.bf16.mxu0 0
      %798 = vmatmul.mubr.bf16.gmra.mxu0 %v637
      %v799 = vpop.f32.mrf.mxu0
      %v800 = vadd.f32 %v659, %v799
      %v801 = vpop.f32.mrf.mxu0
      %v802 = vpop.f32.mrf.mxu0
      %v803 = vadd.f32 %v659, %v802
      %v804 = vpop.f32.mrf.mxu0
      %805 = vdwg.mxu0
      %v806 = vmax.f32 %v744, 0.0
      %v807 = vmax.f32 %v747, 0.0
      %v808 = vmax.f32 %v752, 0.0
      %v809 = vmax.f32 %v755, 0.0
      %v810 = vmax.f32 %v760, 0.0
      %v811 = vmax.f32 %v763, 0.0
      %v812 = vmax.f32 %v768, 0.0
      %v813 = vmax.f32 %v771, 0.0
      %v814 = vmax.f32 %v776, 0.0
      %v815 = vmax.f32 %v779, 0.0
      %v816 = vmax.f32 %v784, 0.0
      %v817 = vmax.f32 %v787, 0.0
      %v818 = vmax.f32 %v792, 0.0
      %v819 = vmax.f32 %v795, 0.0
      %v820 = vmax.f32 %v800, 0.0
      %v821 = vmax.f32 %v803, 0.0
      %v822 = vpack.c.bf16 %v807, %v806
      %v823 = vpack.c.bf16 %v809, %v808
      %v824 = vpack.c.bf16 %v811, %v810
      %v825 = vpack.c.bf16 %v813, %v812
      %v826 = vpack.c.bf16 %v815, %v814
      %v827 = vpack.c.bf16 %v817, %v816
      %v828 = vpack.c.bf16 %v819, %v818
      %v829 = vpack.c.bf16 %v821, %v820
      %v830 = vld [vmem:[%s5] sm:$0xf]
      %v831 = vld [vmem:[%s5 + $0x4] sm:$0xf]
      %v832 = vld [vmem:[%s5 + $0x8] sm:$0xf]
      %v833 = vld [vmem:[%s5 + $0xc] sm:$0xf]
      %v834 = vld [vmem:[%s5 + $0x10] sm:$0xf]
      %v835 = vld [vmem:[%s5 + $0x14] sm:$0xf]
      %v836 = vld [vmem:[%s5 + $0x18] sm:$0xf]
      %v837 = vld [vmem:[%s5 + $0x1c] sm:$0xf]
      %v838 = vld [vmem:[%s5 + $0x20] sm:$0xf]
      %v839 = vld [vmem:[%s5 + $0x24] sm:$0xf]
      %v840 = vld [vmem:[%s5 + $0x28] sm:$0xf]
      %v841 = vld [vmem:[%s5 + $0x2c] sm:$0xf]
      %v842 = vld [vmem:[%s5 + $0x30] sm:$0xf]
      %v843 = vld [vmem:[%s5 + $0x34] sm:$0xf]
      %v844 = vld [vmem:[%s5 + $0x38] sm:$0xf]
      %v845 = vld [vmem:[%s5 + $0x3c] sm:$0xf]
      %v846 = vld [vmem:[%s6] sm:$0x1]
      %v848 = vlaneseq
      %v849 = vshrl.u32 %v848, 7
      %v850 = vsub.s32 0, %v849
      %v851 = vrot.slane %v846, %v850
      %v869 = vunpack.c.l.b16 %v830
      %v870 = vunpack.c.l.b16 %v831
      %v871 = vunpack.c.l.b16 %v832
      %v872 = vunpack.c.l.b16 %v833
      %v873 = vunpack.c.l.b16 %v834
      %v874 = vunpack.c.l.b16 %v835
      %v875 = vunpack.c.l.b16 %v836
      %v876 = vunpack.c.l.b16 %v837
      %v877 = vunpack.c.l.b16 %v838
      %v878 = vunpack.c.l.b16 %v839
      %v879 = vunpack.c.l.b16 %v840
      %v880 = vunpack.c.l.b16 %v841
      %v881 = vunpack.c.l.b16 %v842
      %v882 = vunpack.c.l.b16 %v843
      %v883 = vunpack.c.l.b16 %v844
      %v884 = vunpack.c.l.b16 %v845
      %v885 = vpack.c.b16 %v870, %v869
      %v886 = vpack.c.b16 %v872, %v871
      %v887 = vpack.c.b16 %v874, %v873
      %v888 = vpack.c.b16 %v876, %v875
      %v889 = vpack.c.b16 %v878, %v877
      %v890 = vpack.c.b16 %v880, %v879
      %v891 = vpack.c.b16 %v882, %v881
      %v892 = vpack.c.b16 %v884, %v883
      %901 = vmatprep.subr.bf16.mxu0 0
      %902 = vmatpush1.bf16.msra.mxu0 %v892
      %903 = vmatprep.subr.bf16.mxu0 0
      %904 = vmatpush1.bf16.msra.mxu0 %v891
      %905 = vmatprep.subr.bf16.mxu0 0
      %906 = vmatpush1.bf16.msra.mxu0 %v890
      %907 = vmatprep.subr.bf16.mxu0 0
      %908 = vmatpush1.bf16.msra.mxu0 %v889
      %909 = vmatprep.subr.bf16.mxu0 0
      %910 = vmatpush1.bf16.msra.mxu0 %v888
      %911 = vmatprep.subr.bf16.mxu0 0
      %912 = vmatpush1.bf16.msra.mxu0 %v887
      %913 = vmatprep.subr.bf16.mxu0 0
      %914 = vmatpush1.bf16.msra.mxu0 %v886
      %915 = vmatprep.subr.bf16.mxu0 0
      %916 = vmatpush1.bf16.msra.mxu0 %v885
      %917 = vmatprep.subr.bf16.mxu0 0
      %918 = vmatpush2.bf16.msra.mxu0 0
      %919 = vmatprep.subr.bf16.mxu0 0
      %920 = vmatpush2.bf16.msra.mxu0 0
      %921 = vmatprep.subr.bf16.mxu0 0
      %922 = vmatpush2.bf16.msra.mxu0 0
      %923 = vmatprep.subr.bf16.mxu0 0
      %924 = vmatpush2.bf16.msra.mxu0 0
      %925 = vmatprep.subr.bf16.mxu0 0
      %926 = vmatpush2.bf16.msra.mxu0 0
      %927 = vmatprep.subr.bf16.mxu0 0
      %928 = vmatpush2.bf16.msra.mxu0 0
      %929 = vmatprep.subr.bf16.mxu0 0
      %930 = vmatpush2.bf16.msra.mxu0 0
      %931 = vmatprep.subr.bf16.mxu0 0
      %932 = vmatpush2.bf16.msra.mxu0 0
      %933 = vmatprep.mubr.bf16.mxu0 0
      %934 = vmatmul.mubr.bf16.gmra.mxu0 %v822
      %v935 = vpop.f32.mrf.mxu0
      %v936 = vadd.f32 %v851, %v935
      %v937 = vpop.f32.mrf.mxu0
      %v938 = vpop.f32.mrf.mxu0
      %v939 = vadd.f32 %v851, %v938
      %v940 = vpop.f32.mrf.mxu0
      %941 = vmatprep.mubr.bf16.mxu0 0
      %942 = vmatmul.mubr.bf16.gmra.mxu0 %v823
      %v943 = vpop.f32.mrf.mxu0
      %v944 = vadd.f32 %v851, %v943
      %v945 = vpop.f32.mrf.mxu0
      %v946 = vpop.f32.mrf.mxu0
      %v947 = vadd.f32 %v851, %v946
      %v948 = vpop.f32.mrf.mxu0
      %949 = vmatprep.mubr.bf16.mxu0 0
      %950 = vmatmul.mubr.bf16.gmra.mxu0 %v824
      %v951 = vpop.f32.mrf.mxu0
      %v952 = vadd.f32 %v851, %v951
      %v953 = vpop.f32.mrf.mxu0
      %v954 = vpop.f32.mrf.mxu0
      %v955 = vadd.f32 %v851, %v954
      %v956 = vpop.f32.mrf.mxu0
      %957 = vmatprep.mubr.bf16.mxu0 0
      %958 = vmatmul.mubr.bf16.gmra.mxu0 %v825
      %v959 = vpop.f32.mrf.mxu0
      %v960 = vadd.f32 %v851, %v959
      %v961 = vpop.f32.mrf.mxu0
      %v962 = vpop.f32.mrf.mxu0
      %v963 = vadd.f32 %v851, %v962
      %v964 = vpop.f32.mrf.mxu0
      %965 = vmatprep.mubr.bf16.mxu0 0
      %966 = vmatmul.mubr.bf16.gmra.mxu0 %v826
      %v967 = vpop.f32.mrf.mxu0
      %v968 = vadd.f32 %v851, %v967
      %v969 = vpop.f32.mrf.mxu0
      %v970 = vpop.f32.mrf.mxu0
      %v971 = vadd.f32 %v851, %v970
      %v972 = vpop.f32.mrf.mxu0
      %973 = vmatprep.mubr.bf16.mxu0 0
      %974 = vmatmul.mubr.bf16.gmra.mxu0 %v827
      %v975 = vpop.f32.mrf.mxu0
      %v976 = vadd.f32 %v851, %v975
      %v977 = vpop.f32.mrf.mxu0
      %v978 = vpop.f32.mrf.mxu0
      %v979 = vadd.f32 %v851, %v978
      %v980 = vpop.f32.mrf.mxu0
      %981 = vmatprep.mubr.bf16.mxu0 0
      %982 = vmatmul.mubr.bf16.gmra.mxu0 %v828
      %v983 = vpop.f32.mrf.mxu0
      %v984 = vadd.f32 %v851, %v983
      %v985 = vpop.f32.mrf.mxu0
      %v986 = vpop.f32.mrf.mxu0
      %v987 = vadd.f32 %v851, %v986
      %v988 = vpop.f32.mrf.mxu0
      %989 = vmatprep.mubr.bf16.mxu0 0
      %990 = vmatmul.mubr.bf16.gmra.mxu0 %v829
      %v991 = vpop.f32.mrf.mxu0
      %v992 = vadd.f32 %v851, %v991
      %v993 = vpop.f32.mrf.mxu0
      %v994 = vpop.f32.mrf.mxu0
      %v995 = vadd.f32 %v851, %v994
      %v996 = vpop.f32.mrf.mxu0
      %997 = vdwg.mxu0
      %998 = vst [vmem:[%s283] sm:$0xff] %v936
      %999 = vst [vmem:[%s283 + $0x8] sm:$0xff] %v939
      %1000 = vst [vmem:[%s283 + $0x10] sm:$0xff] %v944
      %1001 = vst [vmem:[%s283 + $0x18] sm:$0xff] %v947
      %1002 = vst [vmem:[%s283 + $0x20] sm:$0xff] %v952
      %1003 = vst [vmem:[%s283 + $0x28] sm:$0xff] %v955
      %1004 = vst [vmem:[%s283 + $0x30] sm:$0xff] %v960
      %1005 = vst [vmem:[%s283 + $0x38] sm:$0xff] %v963
      %1006 = vst [vmem:[%s283 + $0x40] sm:$0xff] %v968
      %1007 = vst [vmem:[%s283 + $0x48] sm:$0xff] %v971
      %1008 = vst [vmem:[%s283 + $0x50] sm:$0xff] %v976
      %1009 = vst [vmem:[%s283 + $0x58] sm:$0xff] %v979
      %1010 = vst [vmem:[%s283 + $0x60] sm:$0xff] %v984
      %1011 = vst [vmem:[%s283 + $0x68] sm:$0xff] %v987
      %1012 = vst [vmem:[%s283 + $0x70] sm:$0xff] %v992
      %1013 = vst [vmem:[%s283 + $0x78] sm:$0xff] %v995
      %s1014 = smul.u32 16, %s18
      %p1015 = scmp.lt.s32.totalorder %s1014, 47
      %s1016 = scalar_select %p1015, %s1014, 47
      %s1017 = smul.addr %s1016, 8
      %s1018 = scalar_lea.vmem %s7, %s1017
      // Predicated region
      $region49: #{box_head_predictor.1} parent=47 // pred_check
        %p1019 = pneg %p188
      $region50: #{box_head_predictor.1} parent=47 // pred_check_branch
        %1021 = sbr.rel (%p1019) target = $region52
      $region51: #{box_head_predictor.1} parent=47 // pred_region
        %s1022 = smul.u32 16, %s18
      $region52: #{box_head_predictor.1} parent=47 // pred_fallthru
        _
    $region48: #{box_head_predictor.1} parent=5 // pred_fallthru
      _
    %p1023 = scmp.le.s32.totalorder 2, %s13
    // Predicated region
    $region53: #{box_head_predictor.1} parent=5 // pred_check
      %p1024 = pneg %p1023
    $region54: #{box_head_predictor.1} parent=5 // pred_check_branch
      %1026 = sbr.rel (%p1024) target = $region56
    $region55: #{box_head_predictor.1} parent=5 // pred_region
      %s1027 = ssub.s32 %s13, 2
      // Predicated region
      $region57: #{box_head_predictor.1} parent=55 // pred_check
        %p1028 = pneg %p194
      $region58: #{box_head_predictor.1} parent=55 // pred_check_branch
        %1030 = sbr.rel (%p1028) target = $region60
      $region59: #{box_head_predictor.1} parent=55 // pred_region
        %s1031 = smul.u32 16, %s19
        %p1032 = scmp.lt.s32.totalorder %s1031, 47
        %s1033 = scalar_select %p1032, %s1031, 47
        %s1034 = smul.addr %s1033, 8
        %s1035 = scalar_lea.vmem %s7, %s1034
      $region60: #{box_head_predictor.1} parent=55 // pred_fallthru
        _
    $region56: #{box_head_predictor.1} parent=5 // pred_fallthru
      _
  $region6: #{box_head_predictor.1} parent=0 // loop_footer
    %s17 = sadd.s32 1, %s13
  $region7: #{box_head_predictor.1} parent=0 // loop_footer_branch
    %12 = sbr.rel target = $region3
  $region8: #{box_head_predictor.1} parent=0 // loop_exit
    _

</llo_original>
